<compile_context>
chip_gen: v7x
topology: tpu7x:2x2x1
jax: 0.10.0
libtpu: 0.0.40
codegen_flags: <defaults>
</compile_context>

<pallas_src>
import functools
import math

import jax
import jax.numpy as jnp
from jax import lax
from jax.experimental import pallas as pl
from jax.experimental.pallas import tpu as pltpu

EPSILON = 1e-15  # gtorch_utils.constants.EPSILON


def _tversky_sums_kernel(p_ref, t_ref, sp_out, st_out, pt_out,
                         sp_acc, st_acc, pt_acc,
                         *, rows_total, block_rows, k_per_group, needs_mask):
    """Grid: (batch b [parallel], core-split p [parallel], row-chunk k [red])."""
    k = pl.program_id(2)

    @pl.when(k == 0)
    def _():
        sp_acc[...] = jnp.zeros_like(sp_acc)
        st_acc[...] = jnp.zeros_like(st_acc)
        pt_acc[...] = jnp.zeros_like(pt_acc)

    # Blocks are (1, TR, L); drop the leading batch dim.  Cast in-kernel so
    # sub-32-bit inputs stream from HBM at native width.
    p = p_ref[0].astype(jnp.float32)   # (TR, L)
    t = t_ref[0].astype(jnp.float32)   # (TR, L)

    if needs_mask:
        # Global row-block index for this step; rows past `rows_total` are
        # either the ragged tail of the last block or a fully clamped
        # (duplicate) block from the core split -> zero both p and t so all
        # three sums are exact.
        g = pl.program_id(1) * k_per_group + k
        valid = rows_total - g * block_rows          # may be <= 0 or > TR
        row = lax.broadcasted_iota(jnp.int32, (block_rows, 1), 0)
        m = (row < valid).astype(jnp.float32)        # (TR, 1)
        p = p * m
        t = t * m

    # One multiply per element; sublane-axis reduce only (lane-wide (1, L)
    # accumulators).  The cross-lane reduce is deferred to the wrapper.
    sp_acc[...] += jnp.sum(p, axis=0, keepdims=True)
    st_acc[...] += jnp.sum(t, axis=0, keepdims=True)
    pt_acc[...] += jnp.sum(p * t, axis=0, keepdims=True)

    @pl.when(k == pl.num_programs(2) - 1)
    def _():
        lanes = sp_acc.shape[-1]
        sp_out[...] = sp_acc[...].reshape(1, 1, 1, lanes)
        st_out[...] = st_acc[...].reshape(1, 1, 1, lanes)
        pt_out[...] = pt_acc[...].reshape(1, 1, 1, lanes)


def tversky_loss(preds, targets, alpha=0.3, beta=0.7):
    """Computes TverskyLoss(alpha, beta)(preds, targets) for NCHW inputs."""
    assert preds.shape == targets.shape
    B = preds.shape[0]
    N = math.prod(preds.shape[1:])

    # ---- lane extent: largest multiple of 128 dividing N (reshape is free) --
    L = 128
    for cand in (1024, 512, 256, 128):
        if N % cand == 0:
            L = cand
            break

    # Keep native dtypes (no wrapper upcast); the kernel casts to f32.
    p2 = preds.reshape(B, N)
    t2 = targets.reshape(B, N)
    Nr = -(-N // L) * L
    if Nr != N:
        # Only fires when N is not a multiple of 128: pad the tail by < 128
        # elements/sample.  Zero padding is exact for all three sums.
        # TODO(synk): if this pad ever shows up hot, fuse the producer via
        # CompilerParams(allow_input_fusion=...) instead of materializing.
        pad = ((0, 0), (0, Nr - N))
        p2 = jnp.pad(p2, pad)
        t2 = jnp.pad(t2, pad)
    R = Nr // L
    p3 = p2.reshape(B, R, L)
    t3 = t2.reshape(B, R, L)

    # ---- row-block size: target ~4 MiB per input block ----------------------
    # 2 inputs x 2 pipeline buffers x 4 MiB = 16 MiB, inside the 32 MiB limit
    # on v5e/v6e/v7x while amortizing the ~0.35 us per-step overhead.
    BLOCK_BYTES = 4 * 1024 * 1024
    itemsize = max(p3.dtype.itemsize, t3.dtype.itemsize)
    TR_MAX = max(8, (BLOCK_BYTES // (itemsize * L)) // 8 * 8)
    if R <= TR_MAX:
        TR = R                      # full-dim sublane block (always legal)
        K_total = 1
    else:
        TR = TR_MAX                 # multiple of 8
        K_total = -(-R // TR)

    # v7x has 2 TensorCores: guarantee a parallel axis of extent >= 2 when the
    # batch alone cannot provide one by splitting the row-chunk stream in two.
    P = 2 if (B == 1 and K_total >= 2) else 1
    K = -(-K_total // P)

    needs_mask = (K_total * TR != R) or (P * K != K_total)

    if P * K != K_total:
        def in_map(b, p, k):
            # Clamp over-range blocks (odd K_total split); they are fully
            # masked in-kernel so the duplicate read contributes nothing.
            return (b, jnp.minimum(p * K + k, K_total - 1), 0)
    else:
        def in_map(b, p, k):
            return (b, p * K + k, 0)

    out_map = lambda b, p, k: (b, p, 0, 0)

    kernel = functools.partial(
        _tversky_sums_kernel,
        rows_total=R, block_rows=TR, k_per_group=K, needs_mask=needs_mask)

    out_sds = jax.ShapeDtypeStruct((B, P, 1, L), jnp.float32)
    cost = pl.CostEstimate(
        flops=4 * B * Nr,                   # 1 mul + 3 adds per element
        transcendentals=0,
        bytes_accessed=B * Nr * (p3.dtype.itemsize + t3.dtype.itemsize)
                       + 3 * B * P * L * 4,
    )

    sp, st, spt = pl.pallas_call(
        kernel,
        out_shape=(out_sds, out_sds, out_sds),
        grid_spec=pltpu.PrefetchScalarGridSpec(
            num_scalar_prefetch=0,
            grid=(B, P, K),
            in_specs=[
                pl.BlockSpec((1, TR, L), in_map),
                pl.BlockSpec((1, TR, L), in_map),
            ],
            out_specs=[
                pl.BlockSpec((1, 1, 1, L), out_map),
                pl.BlockSpec((1, 1, 1, L), out_map),
                pl.BlockSpec((1, 1, 1, L), out_map),
            ],
            scratch_shapes=[
                pltpu.VMEM((1, L), jnp.float32),   # sum(p)   accumulator
                pltpu.VMEM((1, L), jnp.float32),   # sum(t)   accumulator
                pltpu.VMEM((1, L), jnp.float32),   # sum(p*t) accumulator
            ],
        ),
        compiler_params=pltpu.CompilerParams(
            dimension_semantics=("parallel", "parallel", "arbitrary"),
            vmem_limit_bytes=32 * 1024 * 1024,     # safe on v5e/v6e/v7x
        ),
        cost_estimate=cost,
    )(p3, t3)

    # Tiny epilogue: combine per-(sample, core-split) lane partials.
    inter = jnp.sum(spt, axis=(1, 2, 3))   # sum(p * t)              (B,)
    sum_p = jnp.sum(sp, axis=(1, 2, 3))    # sum(p)                  (B,)
    sum_t = jnp.sum(st, axis=(1, 2, 3))    # sum(t)                  (B,)
    fp = sum_p - inter                     # == sum(p * (1 - t))
    fn = beta * (sum_t - inter)            # == beta * sum((1 - p) * t)
    # Reference applies beta to fn AGAIN in the denominator (beta**2 * FN).
    score = inter / (inter + alpha * fp + beta * fn + EPSILON)
    return 1.0 - jnp.sum(score) / B


def tversky_loss_ref(preds, targets, alpha=0.3, beta=0.7):
    """Pure-JAX reference mirroring the PyTorch module (incl. double beta)."""
    B = preds.shape[0]
    inter = jnp.sum(preds * targets, axis=(1, 2, 3))
    fp = jnp.sum(preds * (1.0 - targets), axis=(1, 2, 3))
    fn = beta * jnp.sum((1.0 - preds) * targets, axis=(1, 2, 3))
    score = inter / (inter + alpha * fp + beta * fn + EPSILON)
    return 1.0 - jnp.sum(score) / B


if __name__ == "__main__":
    key = jax.random.PRNGKey(0)
    kp, kt = jax.random.split(key)

    B, C, H, W = 2, 4, 16, 16
    # Predicted masks in [0, 1], binary ground-truth masks.
    preds = jax.nn.sigmoid(jax.random.normal(kp, (B, C, H, W), jnp.float32))
    targets = (jax.random.uniform(kt, (B, C, H, W)) > 0.5).astype(jnp.float32)

    loss = tversky_loss(preds, targets, alpha=0.3, beta=0.7)
    loss = jax.block_until_ready(loss)

    ref = tversky_loss_ref(preds, targets, alpha=0.3, beta=0.7)
    # Tolerance accounts for different f32 summation order (tiled + linearity
    # decomposition) vs the single-pass reference.
    assert jnp.allclose(loss, ref, rtol=1e-4, atol=1e-5), (loss, ref)

    print("KERNEL_OK")
</pallas_src>

<mosaic_0001>
module attributes {stable_mosaic.version = 11 : i64} {
  func.func @_tversky_sums_kernel(%arg0: i32, %arg1: i32, %arg2: i32, %arg3: memref<1x1x1024xf32, #tpu.memory_space<vmem>>, %arg4: memref<1x1x1024xf32, #tpu.memory_space<vmem>>, %arg5: memref<1x1x1x1024xf32, #tpu.memory_space<vmem>>, %arg6: memref<1x1x1x1024xf32, #tpu.memory_space<vmem>>, %arg7: memref<1x1x1x1024xf32, #tpu.memory_space<vmem>>, %arg8: memref<1x1024xf32, #tpu.memory_space<vmem>>, %arg9: memref<1x1024xf32, #tpu.memory_space<vmem>>, %arg10: memref<1x1024xf32, #tpu.memory_space<vmem>>) attributes {dimension_semantics = [#tpu.dimension_semantics<parallel>, #tpu.dimension_semantics<parallel>, #tpu.dimension_semantics<arbitrary>], iteration_bounds = array<i64: 2, 1, 1>, scalar_prefetch = 0 : i64, scratch_operands = 3 : i64, tpu.core_type = #tpu.core_type<tc>, window_params = [{transform_indices = @transform_0, window_bounds = array<i64: 1, 1, 1024>}, {transform_indices = @transform_1, window_bounds = array<i64: 1, 1, 1024>}, {transform_indices = @transform_2, window_bounds = array<i64: 1, 1, 1, 1024>}, {transform_indices = @transform_3, window_bounds = array<i64: 1, 1, 1, 1024>}, {transform_indices = @transform_4, window_bounds = array<i64: 1, 1, 1, 1024>}]} {
    %c0_i32 = arith.constant 0 : i32
    %0 = arith.cmpi eq, %arg2, %c0_i32 : i32
    %1 = arith.extui %0 : i1 to i32
    %c0_i32_0 = arith.constant 0 : i32
    %2 = arith.cmpi ne, %1, %c0_i32_0 : i32
    scf.if %2 {
      %cst_22 = arith.constant 0.000000e+00 : f32
      %26 = vector.broadcast %cst_22 : f32 to vector<1x1024xf32>
      %c0_23 = arith.constant 0 : index
      %c0_24 = arith.constant 0 : index
      %27 = vector.load %arg8[%c0_23, %c0_24] : memref<1x1024xf32, #tpu.memory_space<vmem>>, vector<1x1024xf32>
      tpu.vector_store %arg8[%c0_23, %c0_24], %26 {strides = array<i32>} : memref<1x1024xf32, #tpu.memory_space<vmem>>, vector<1x1024xf32>,
      %cst_25 = arith.constant 0.000000e+00 : f32
      %28 = vector.broadcast %cst_25 : f32 to vector<1x1024xf32>
      %c0_26 = arith.constant 0 : index
      %c0_27 = arith.constant 0 : index
      %29 = vector.load %arg9[%c0_26, %c0_27] : memref<1x1024xf32, #tpu.memory_space<vmem>>, vector<1x1024xf32>
      tpu.vector_store %arg9[%c0_26, %c0_27], %28 {strides = array<i32>} : memref<1x1024xf32, #tpu.memory_space<vmem>>, vector<1x1024xf32>,
      %cst_28 = arith.constant 0.000000e+00 : f32
      %30 = vector.broadcast %cst_28 : f32 to vector<1x1024xf32>
      %c0_29 = arith.constant 0 : index
      %c0_30 = arith.constant 0 : index
      %31 = vector.load %arg10[%c0_29, %c0_30] : memref<1x1024xf32, #tpu.memory_space<vmem>>, vector<1x1024xf32>
      tpu.vector_store %arg10[%c0_29, %c0_30], %30 {strides = array<i32>} : memref<1x1024xf32, #tpu.memory_space<vmem>>, vector<1x1024xf32>,
    } else {
    }
    %c0 = arith.constant 0 : index
    %c0_1 = arith.constant 0 : index
    %c0_2 = arith.constant 0 : index
    %3 = vector.load %arg3[%c0, %c0_1, %c0_2] : memref<1x1x1024xf32, #tpu.memory_space<vmem>>, vector<1x1x1024xf32>
    %4 = vector.shape_cast %3 : vector<1x1x1024xf32> to vector<1x1024xf32>
    %c0_3 = arith.constant 0 : index
    %c0_4 = arith.constant 0 : index
    %c0_5 = arith.constant 0 : index
    %5 = vector.load %arg4[%c0_3, %c0_4, %c0_5] : memref<1x1x1024xf32, #tpu.memory_space<vmem>>, vector<1x1x1024xf32>
    %6 = vector.shape_cast %5 : vector<1x1x1024xf32> to vector<1x1024xf32>
    %c0_6 = arith.constant 0 : index
    %c0_7 = arith.constant 0 : index
    %7 = vector.load %arg8[%c0_6, %c0_7] : memref<1x1024xf32, #tpu.memory_space<vmem>>, vector<1x1024xf32>
    %cst = arith.constant dense<0.000000e+00> : vector<1024xf32>
    %8 = vector.multi_reduction <add>, %4, %cst [0] : vector<1x1024xf32> to vector<1024xf32>
    %9 = vector.shape_cast %8 : vector<1024xf32> to vector<1x1024xf32>
    %10 = arith.addf %7, %9 : vector<1x1024xf32>
    %c0_8 = arith.constant 0 : index
    %c0_9 = arith.constant 0 : index
    %11 = vector.load %arg8[%c0_8, %c0_9] : memref<1x1024xf32, #tpu.memory_space<vmem>>, vector<1x1024xf32>
    tpu.vector_store %arg8[%c0_8, %c0_9], %10 {strides = array<i32>} : memref<1x1024xf32, #tpu.memory_space<vmem>>, vector<1x1024xf32>,
    %c0_10 = arith.constant 0 : index
    %c0_11 = arith.constant 0 : index
    %12 = vector.load %arg9[%c0_10, %c0_11] : memref<1x1024xf32, #tpu.memory_space<vmem>>, vector<1x1024xf32>
    %cst_12 = arith.constant dense<0.000000e+00> : vector<1024xf32>
    %13 = vector.multi_reduction <add>, %6, %cst_12 [0] : vector<1x1024xf32> to vector<1024xf32>
    %14 = vector.shape_cast %13 : vector<1024xf32> to vector<1x1024xf32>
    %15 = arith.addf %12, %14 : vector<1x1024xf32>
    %c0_13 = arith.constant 0 : index
    %c0_14 = arith.constant 0 : index
    %16 = vector.load %arg9[%c0_13, %c0_14] : memref<1x1024xf32, #tpu.memory_space<vmem>>, vector<1x1024xf32>
    tpu.vector_store %arg9[%c0_13, %c0_14], %15 {strides = array<i32>} : memref<1x1024xf32, #tpu.memory_space<vmem>>, vector<1x1024xf32>,
    %c0_15 = arith.constant 0 : index
    %c0_16 = arith.constant 0 : index
    %17 = vector.load %arg10[%c0_15, %c0_16] : memref<1x1024xf32, #tpu.memory_space<vmem>>, vector<1x1024xf32>
    %18 = arith.mulf %4, %6 : vector<1x1024xf32>
    %cst_17 = arith.constant dense<0.000000e+00> : vector<1024xf32>
    %19 = vector.multi_reduction <add>, %18, %cst_17 [0] : vector<1x1024xf32> to vector<1024xf32>
    %20 = vector.shape_cast %19 : vector<1024xf32> to vector<1x1024xf32>
    %21 = arith.addf %17, %20 : vector<1x1024xf32>
    %c0_18 = arith.constant 0 : index
    %c0_19 = arith.constant 0 : index
    %22 = vector.load %arg10[%c0_18, %c0_19] : memref<1x1024xf32, #tpu.memory_space<vmem>>, vector<1x1024xf32>
    tpu.vector_store %arg10[%c0_18, %c0_19], %21 {strides = array<i32>} : memref<1x1024xf32, #tpu.memory_space<vmem>>, vector<1x1024xf32>,
    %c0_i32_20 = arith.constant 0 : i32
    %23 = arith.cmpi eq, %arg2, %c0_i32_20 : i32
    %24 = arith.extui %23 : i1 to i32
    %c0_i32_21 = arith.constant 0 : i32
    %25 = arith.cmpi ne, %24, %c0_i32_21 : i32
    scf.if %25 {
      %c0_22 = arith.constant 0 : index
      %c0_23 = arith.constant 0 : index
      %26 = vector.load %arg8[%c0_22, %c0_23] : memref<1x1024xf32, #tpu.memory_space<vmem>>, vector<1x1024xf32>
      %27 = vector.shape_cast %26 : vector<1x1024xf32> to vector<1x1x1x1024xf32>
      %c0_24 = arith.constant 0 : index
      %c0_25 = arith.constant 0 : index
      %c0_26 = arith.constant 0 : index
      %c0_27 = arith.constant 0 : index
      %28 = vector.load %arg5[%c0_24, %c0_25, %c0_26, %c0_27] : memref<1x1x1x1024xf32, #tpu.memory_space<vmem>>, vector<1x1x1x1024xf32>
      tpu.vector_store %arg5[%c0_24, %c0_25, %c0_26, %c0_27], %27 {strides = array<i32>} : memref<1x1x1x1024xf32, #tpu.memory_space<vmem>>, vector<1x1x1x1024xf32>,
      %c0_28 = arith.constant 0 : index
      %c0_29 = arith.constant 0 : index
      %29 = vector.load %arg9[%c0_28, %c0_29] : memref<1x1024xf32, #tpu.memory_space<vmem>>, vector<1x1024xf32>
      %30 = vector.shape_cast %29 : vector<1x1024xf32> to vector<1x1x1x1024xf32>
      %c0_30 = arith.constant 0 : index
      %c0_31 = arith.constant 0 : index
      %c0_32 = arith.constant 0 : index
      %c0_33 = arith.constant 0 : index
      %31 = vector.load %arg6[%c0_30, %c0_31, %c0_32, %c0_33] : memref<1x1x1x1024xf32, #tpu.memory_space<vmem>>, vector<1x1x1x1024xf32>
      tpu.vector_store %arg6[%c0_30, %c0_31, %c0_32, %c0_33], %30 {strides = array<i32>} : memref<1x1x1x1024xf32, #tpu.memory_space<vmem>>, vector<1x1x1x1024xf32>,
      %c0_34 = arith.constant 0 : index
      %c0_35 = arith.constant 0 : index
      %32 = vector.load %arg10[%c0_34, %c0_35] : memref<1x1024xf32, #tpu.memory_space<vmem>>, vector<1x1024xf32>
      %33 = vector.shape_cast %32 : vector<1x1024xf32> to vector<1x1x1x1024xf32>
      %c0_36 = arith.constant 0 : index
      %c0_37 = arith.constant 0 : index
      %c0_38 = arith.constant 0 : index
      %c0_39 = arith.constant 0 : index
      %34 = vector.load %arg7[%c0_36, %c0_37, %c0_38, %c0_39] : memref<1x1x1x1024xf32, #tpu.memory_space<vmem>>, vector<1x1x1x1024xf32>
      tpu.vector_store %arg7[%c0_36, %c0_37, %c0_38, %c0_39], %33 {strides = array<i32>} : memref<1x1x1x1024xf32, #tpu.memory_space<vmem>>, vector<1x1x1x1024xf32>,
    } else {
    }
    return
  }
  func.func @transform_0(%arg0: i32, %arg1: i32, %arg2: i32) -> (i32, i32, i32) {
    %c1_i32 = arith.constant 1 : i32
    %0 = arith.muli %arg1, %c1_i32 : i32
    %1 = arith.addi %0, %arg2 : i32
    %c0_i32 = arith.constant 0 : i32
    %c0_i32_0 = arith.constant 0 : i32
    return %arg0, %1, %c0_i32 : i32, i32, i32
  }
  func.func @transform_1(%arg0: i32, %arg1: i32, %arg2: i32) -> (i32, i32, i32) {
    %c1_i32 = arith.constant 1 : i32
    %0 = arith.muli %arg1, %c1_i32 : i32
    %1 = arith.addi %0, %arg2 : i32
    %c0_i32 = arith.constant 0 : i32
    %c0_i32_0 = arith.constant 0 : i32
    return %arg0, %1, %c0_i32 : i32, i32, i32
  }
  func.func @transform_2(%arg0: i32, %arg1: i32, %arg2: i32) -> (i32, i32, i32, i32) {
    %c0_i32 = arith.constant 0 : i32
    %c0_i32_0 = arith.constant 0 : i32
    %c0_i32_1 = arith.constant 0 : i32
    return %arg0, %arg1, %c0_i32, %c0_i32_0 : i32, i32, i32, i32
  }
  func.func @transform_3(%arg0: i32, %arg1: i32, %arg2: i32) -> (i32, i32, i32, i32) {
    %c0_i32 = arith.constant 0 : i32
    %c0_i32_0 = arith.constant 0 : i32
    %c0_i32_1 = arith.constant 0 : i32
    return %arg0, %arg1, %c0_i32, %c0_i32_0 : i32, i32, i32, i32
  }
  func.func @transform_4(%arg0: i32, %arg1: i32, %arg2: i32) -> (i32, i32, i32, i32) {
    %c0_i32 = arith.constant 0 : i32
    %c0_i32_0 = arith.constant 0 : i32
    %c0_i32_1 = arith.constant 0 : i32
    return %arg0, %arg1, %c0_i32, %c0_i32_0 : i32, i32, i32, i32
  }
}

</mosaic_0001>

<llo_original>
// kernel: tpu_custom_call.1
$region0: #{tpu_custom_call.1}
  #allocation0 [shape = 'u32[]', space=smem, size = 0x4, offset = 0x4, fixed_abs, tag = 'smem constant byte address 0x4 - core index']
  #allocation1 [shape = 'u32[144,128]{1,0:T(1,128)}', space=vmem, size = 0x12000, scoped, tag = 'internal scratch']
  #allocation2 [shape = 'f32[1,1024]{1,0:T(1,128)}', space=vmem, size = 0x1000, scoped, tag = 'scratch operand']
  #allocation3 [shape = 'f32[1,1024]{1,0:T(1,128)}', space=vmem, size = 0x1000, scoped, tag = 'scratch operand']
  #allocation4 [shape = 'f32[1,1024]{1,0:T(1,128)}', space=vmem, size = 0x1000, scoped, tag = 'scratch operand']
  %s0 = inlined_call_operand.hbm [shape: f32[2,1,1024], index: 0, kind: input, shape index: {}]
  %s1 = inlined_call_operand.hbm [shape: f32[2,1,1024], index: 1, kind: input, shape index: {}]
  %s2 = inlined_call_operand.hbm [shape: f32[2,1,1,1024], index: 2, kind: output, shape index: {0}]
  %s3 = inlined_call_operand.hbm [shape: f32[2,1,1,1024], index: 3, kind: output, shape index: {1}]
  %s4 = inlined_call_operand.hbm [shape: f32[2,1,1,1024], index: 4, kind: output, shape index: {2}]
  %5 = xla_tuple %s2, %s3, %s4
  %s6 = sld [smem:[#allocation0]]
  $region73: #{tpu_custom_call.1} parent=0
    _
  %s8 = ssub.s32 1, %s6
  %s9 = scalar_select 0, %s8, %s6
  $region1: #{tpu_custom_call.1} parent=0
    #allocation5 [shape = 'u8[8192]{0}', space=vmem, size = 0x2000, scoped, tag = 'input window, operand 0']
    #allocation6 [shape = 's32[2]{0}', space=sflag, size = 0x8, scoped, tag = 'scoped memory for tpu_custom_call.1']
    #allocation7 [shape = 's32[2]{0}', space=sflag, size = 0x8, scoped, tag = 'scoped memory for tpu_custom_call.1']
    #allocation8 [shape = 'u8[8192]{0}', space=vmem, size = 0x2000, scoped, tag = 'input window, operand 1']
    #allocation9 [shape = 's32[2]{0}', space=sflag, size = 0x8, scoped, tag = 'scoped memory for tpu_custom_call.1']
    #allocation10 [shape = 'u8[8192]{0}', space=vmem, size = 0x2000, scoped, tag = 'output window, operand 0']
    #allocation11 [shape = 'u8[8192]{0}', space=vmem, size = 0x2000, scoped, tag = 'output window, operand 1']
    #allocation12 [shape = 's32[2]{0}', space=sflag, size = 0x8, scoped, tag = 'scoped memory for tpu_custom_call.1']
    #allocation13 [shape = 'u8[8192]{0}', space=vmem, size = 0x2000, scoped, tag = 'output window, operand 2']
    %10 = vsyncpa [#allocation6], 0
    %s11 = scalar_lea.sflag [#allocation6], 1
    %12 = vsyncpa %s11, 0
    %13 = vsyncpa [#allocation9], 0
    %s14 = scalar_lea.sflag [#allocation9], 1
    %15 = vsyncpa %s14, 0
    %16 = vsyncpa [#allocation7], 0
    %s17 = scalar_lea.sflag [#allocation7], 1
    %18 = vsyncpa %s17, 0
    %19 = vsyncpa [#allocation12], 0
    %s20 = scalar_lea.sflag [#allocation12], 1
    %21 = vsyncpa %s20, 0
    loop: start=0, step=1, limit=4
    $region2: #{tpu_custom_call.1} parent=1 // loop_pre_header
      _
    $region3: #{tpu_custom_call.1} parent=1 // loop_header
      %s23 = sphi 0, %s27
      %p24 = scmp.ge.s32.totalorder %s23, 4
      %s30 = sphi 0, %s49
      %s31 = sphi 0, %s45
      %s32 = sphi 0, %s41
      %s33 = sphi 0, %s30
      %s34 = sphi 0, %s31
      %s35 = sphi 0, %s32
      %s36 = sphi 0, %s33
      %s37 = sphi 0, %s34
      %s38 = sphi 0, %s35
      %s56 = sphi 0, %s58
      %s59 = sphi 0, %s56
      %s60 = sphi 0, %s59
      %s76 = sphi 0, %s60
      %s86 = sphi 0, %s88
      %s89 = sphi 0, %s86
      %s90 = sphi 0, %s89
      %s106 = sphi 0, %s90
      %s114 = sphi 0, %s116
      %s117 = sphi 0, %s114
      %s118 = sphi 0, %s117
      %s134 = sphi 0, %s118
      %s142 = sphi 0, %s144
      %s145 = sphi 0, %s142
      %s146 = sphi 0, %s145
      %s162 = sphi 0, %s146
      %s170 = sphi 0, %s172
      %s173 = sphi 0, %s170
      %s174 = sphi 0, %s173
      %s190 = sphi 0, %s174
    $region4: #{tpu_custom_call.1} parent=1 // loop_header_branch
      %26 = sbr.rel (%p24) target = $region8
    $region5: #{tpu_custom_call.1} parent=1 // loop_body
      %s28 = ssub.s32 %s23, 1
      %s29 = ssub.s32 %s23, 2
      %s39 = sadd.s32 1, %s32
      %p40 = scmp.ge.s32.totalorder %s39, 1
      %s41 = scalar_select %p40, 0, %s39
      %s42 = sadd.s32 1, %s31
      %s43 = scalar_select %p40, %s42, %s31
      %p44 = scmp.ge.s32.totalorder %s43, 1
      %s45 = scalar_select %p44, 0, %s43
      %s46 = sadd.s32 1, %s30
      %s47 = scalar_select %p44, %s46, %s30
      %p48 = scmp.ge.s32.totalorder %s47, 2
      %s49 = scalar_select %p48, 0, %s47
      %s50 = sadd.s32 %s31, %s32
      %s51 = sadd.s32 %s45, %s41
      %s52 = ssub.s32 %s30, %s49
      %s53 = ssub.s32 %s50, %s51
      %s54 = sor.u32 %s52, %s53
      %p55 = scmp.eq.s32.totalorder %s54, 0
      %s57 = sadd.s32 %s56, 1
      %s58 = scalar_select %p55, %s56, %s57
      %p61 = pneg %p55
      %p62 = scmp.eq.s32.totalorder %s23, 1
      %p63 = por %p61, %p62
      %p64 = scmp.ne.s32.totalorder %s56, %s59
      %p65 = scmp.eq.s32.totalorder %s23, 0
      %p66 = por %p64, %p65
      %p67 = scmp.ne.s32.totalorder %s56, %s59
      %p68 = scmp.eq.s32.totalorder %s28, 1
      %p69 = por %p67, %p68
      %p70 = scmp.ne.s32.totalorder %s59, %s60
      %p71 = scmp.eq.s32.totalorder %s28, 0
      %p72 = por %p70, %p71
      %p73 = scmp.ne.s32.totalorder %s59, %s60
      %p74 = scmp.eq.s32.totalorder %s29, 1
      %p75 = por %p73, %p74
      %p77 = scmp.ne.s32.totalorder %s60, %s76
      %p78 = scmp.eq.s32.totalorder %s29, 0
      %p79 = por %p77, %p78
      %s80 = sadd.s32 %s31, %s32
      %s81 = sadd.s32 %s45, %s41
      %s82 = ssub.s32 %s30, %s49
      %s83 = ssub.s32 %s80, %s81
      %s84 = sor.u32 %s82, %s83
      %p85 = scmp.eq.s32.totalorder %s84, 0
      %s87 = sadd.s32 %s86, 1
      %s88 = scalar_select %p85, %s86, %s87
      %p91 = pneg %p85
      %p92 = scmp.eq.s32.totalorder %s23, 1
      %p93 = por %p91, %p92
      %p94 = scmp.ne.s32.totalorder %s86, %s89
      %p95 = scmp.eq.s32.totalorder %s23, 0
      %p96 = por %p94, %p95
      %p97 = scmp.ne.s32.totalorder %s86, %s89
      %p98 = scmp.eq.s32.totalorder %s28, 1
      %p99 = por %p97, %p98
      %p100 = scmp.ne.s32.totalorder %s89, %s90
      %p101 = scmp.eq.s32.totalorder %s28, 0
      %p102 = por %p100, %p101
      %p103 = scmp.ne.s32.totalorder %s89, %s90
      %p104 = scmp.eq.s32.totalorder %s29, 1
      %p105 = por %p103, %p104
      %p107 = scmp.ne.s32.totalorder %s90, %s106
      %p108 = scmp.eq.s32.totalorder %s29, 0
      %p109 = por %p107, %p108
      %s110 = ssub.s32 %s30, %s49
      %s111 = ssub.s32 %s31, %s45
      %s112 = sor.u32 %s110, %s111
      %p113 = scmp.eq.s32.totalorder %s112, 0
      %s115 = sadd.s32 %s114, 1
      %s116 = scalar_select %p113, %s114, %s115
      %p119 = pneg %p113
      %p120 = scmp.eq.s32.totalorder %s23, 1
      %p121 = por %p119, %p120
      %p122 = scmp.ne.s32.totalorder %s114, %s117
      %p123 = scmp.eq.s32.totalorder %s23, 0
      %p124 = por %p122, %p123
      %p125 = scmp.ne.s32.totalorder %s114, %s117
      %p126 = scmp.eq.s32.totalorder %s28, 1
      %p127 = por %p125, %p126
      %p128 = scmp.ne.s32.totalorder %s117, %s118
      %p129 = scmp.eq.s32.totalorder %s28, 0
      %p130 = por %p128, %p129
      %p131 = scmp.ne.s32.totalorder %s117, %s118
      %p132 = scmp.eq.s32.totalorder %s29, 1
      %p133 = por %p131, %p132
      %p135 = scmp.ne.s32.totalorder %s118, %s134
      %p136 = scmp.eq.s32.totalorder %s29, 0
      %p137 = por %p135, %p136
      %s138 = ssub.s32 %s30, %s49
      %s139 = ssub.s32 %s31, %s45
      %s140 = sor.u32 %s138, %s139
      %p141 = scmp.eq.s32.totalorder %s140, 0
      %s143 = sadd.s32 %s142, 1
      %s144 = scalar_select %p141, %s142, %s143
      %p147 = pneg %p141
      %p148 = scmp.eq.s32.totalorder %s23, 1
      %p149 = por %p147, %p148
      %p150 = scmp.ne.s32.totalorder %s142, %s145
      %p151 = scmp.eq.s32.totalorder %s23, 0
      %p152 = por %p150, %p151
      %p153 = scmp.ne.s32.totalorder %s142, %s145
      %p154 = scmp.eq.s32.totalorder %s28, 1
      %p155 = por %p153, %p154
      %p156 = scmp.ne.s32.totalorder %s145, %s146
      %p157 = scmp.eq.s32.totalorder %s28, 0
      %p158 = por %p156, %p157
      %p159 = scmp.ne.s32.totalorder %s145, %s146
      %p160 = scmp.eq.s32.totalorder %s29, 1
      %p161 = por %p159, %p160
      %p163 = scmp.ne.s32.totalorder %s146, %s162
      %p164 = scmp.eq.s32.totalorder %s29, 0
      %p165 = por %p163, %p164
      %s166 = ssub.s32 %s30, %s49
      %s167 = ssub.s32 %s31, %s45
      %s168 = sor.u32 %s166, %s167
      %p169 = scmp.eq.s32.totalorder %s168, 0
      %s171 = sadd.s32 %s170, 1
      %s172 = scalar_select %p169, %s170, %s171
      %p175 = pneg %p169
      %p176 = scmp.eq.s32.totalorder %s23, 1
      %p177 = por %p175, %p176
      %p178 = scmp.ne.s32.totalorder %s170, %s173
      %p179 = scmp.eq.s32.totalorder %s23, 0
      %p180 = por %p178, %p179
      %p181 = scmp.ne.s32.totalorder %s170, %s173
      %p182 = scmp.eq.s32.totalorder %s28, 1
      %p183 = por %p181, %p182
      %p184 = scmp.ne.s32.totalorder %s173, %s174
      %p185 = scmp.eq.s32.totalorder %s28, 0
      %p186 = por %p184, %p185
      %p187 = scmp.ne.s32.totalorder %s173, %s174
      %p188 = scmp.eq.s32.totalorder %s29, 1
      %p189 = por %p187, %p188
      %p191 = scmp.ne.s32.totalorder %s174, %s190
      %p192 = scmp.eq.s32.totalorder %s29, 0
      %p193 = por %p191, %p192
      %p194 = scmp.le.s32.totalorder 1, %s23
      %p195 = scmp.lt.s32.totalorder %s23, 3
      %p196 = pnand %p194, %p195
      %p197 = pneg %p196
      // Predicated region
      $region9: #{tpu_custom_call.1} parent=5 // pred_check
        _
      $region10: #{tpu_custom_call.1} parent=5 // pred_check_branch
        %199 = sbr.rel (%p196) target = $region12
      $region11: #{tpu_custom_call.1} parent=5 // pred_region
        %s200 = ssub.s32 %s23, 1
      $region12: #{tpu_custom_call.1} parent=5 // pred_fallthru
        _
      %p201 = scmp.lt.s32.totalorder %s23, 2
      // Predicated region
      $region13: #{tpu_custom_call.1} parent=5 // pred_check
        %p202 = pneg %p201
      $region14: #{tpu_custom_call.1} parent=5 // pred_check_branch
        %204 = sbr.rel (%p202) target = $region16
      $region15: #{tpu_custom_call.1} parent=5 // pred_region
        // Predicated region
        $region17: #{tpu_custom_call.1} parent=15 // pred_check
          %p205 = pneg %p66
        $region18: #{tpu_custom_call.1} parent=15 // pred_check_branch
          %207 = sbr.rel (%p205) target = $region20
        $region19: #{tpu_custom_call.1} parent=15 // pred_region
          %s208 = sand.u32 %s56, 1
          %s209 = scalar_lea.sflag [#allocation6], %s208
          %s210 = sand.u32 %s56, 1
          %s211 = smul.addr %s210, 8
          %s212 = scalar_lea.vmem [#allocation5], %s211
          %s213 = sadd.s32 %s31, %s32
          %s215 = ssub.s32 128, 128
          %216 = vsyncadd %s209, %s215
          %s217 = smul.addr %s213, 8
          %s218 = smul.addr %s30, 8
          %s219 = sadd.s32 %s217, %s218
          %s220 = smul.addr %s219, 16
          %s221 = scalar_lea.hbm %s0, %s220
          %s223 = sshll.u32 %s212, 4
          %s224 = int_to_ptr.vmem [resolvable:$true] %s223
          %226 = dma.hbm_to_vmem [thread:$0]  %s221, 128, %s224, %s209
        $region20: #{tpu_custom_call.1} parent=15 // pred_fallthru
          _
        // Predicated region
        $region21: #{tpu_custom_call.1} parent=15 // pred_check
          %p227 = pneg %p96
        $region22: #{tpu_custom_call.1} parent=15 // pred_check_branch
          %229 = sbr.rel (%p227) target = $region24
        $region23: #{tpu_custom_call.1} parent=15 // pred_region
          %s230 = sand.u32 %s86, 1
          %s231 = scalar_lea.sflag [#allocation9], %s230
          %s232 = sand.u32 %s86, 1
          %s233 = smul.addr %s232, 8
          %s234 = scalar_lea.vmem [#allocation8], %s233
          %s235 = sadd.s32 %s31, %s32
          %s237 = ssub.s32 128, 128
          %238 = vsyncadd %s231, %s237
          %s239 = smul.addr %s235, 8
          %s240 = smul.addr %s30, 8
          %s241 = sadd.s32 %s239, %s240
          %s242 = smul.addr %s241, 16
          %s243 = scalar_lea.hbm %s1, %s242
          %s245 = sshll.u32 %s234, 4
          %s246 = int_to_ptr.vmem [resolvable:$true] %s245
          %248 = dma.hbm_to_vmem [thread:$0]  %s243, 128, %s246, %s231
        $region24: #{tpu_custom_call.1} parent=15 // pred_fallthru
          _
      $region16: #{tpu_custom_call.1} parent=5 // pred_fallthru
        _
      %p249 = scmp.le.s32.totalorder 1, %s23
      %p250 = scmp.lt.s32.totalorder %s23, 3
      %p251 = pnand %p249, %p250
      %p252 = pneg %p251
      // Predicated region
      $region25: #{tpu_custom_call.1} parent=5 // pred_check
        _
      $region26: #{tpu_custom_call.1} parent=5 // pred_check_branch
        %254 = sbr.rel (%p251) target = $region28
      $region27: #{tpu_custom_call.1} parent=5 // pred_region
        %s255 = ssub.s32 %s23, 1
        %s256 = sand.u32 %s59, 1
        %s257 = scalar_lea.sflag [#allocation6], %s256
        %s258 = sand.u32 %s59, 1
        %s259 = smul.addr %s258, 8
        %s260 = scalar_lea.vmem [#allocation5], %s259
        // Predicated region
        $region29: #{tpu_custom_call.1} parent=27 // pred_check
          %p261 = pneg %p72
        $region30: #{tpu_custom_call.1} parent=27 // pred_check_branch
          %263 = sbr.rel (%p261) target = $region32
        $region31: #{tpu_custom_call.1} parent=27 // pred_region
          %264 = dma.done %s257, 128
        $region32: #{tpu_custom_call.1} parent=27 // pred_fallthru
          _
        %s265 = sand.u32 %s89, 1
        %s266 = scalar_lea.sflag [#allocation9], %s265
        %s267 = sand.u32 %s89, 1
        %s268 = smul.addr %s267, 8
        %s269 = scalar_lea.vmem [#allocation8], %s268
        // Predicated region
        $region33: #{tpu_custom_call.1} parent=27 // pred_check
          %p270 = pneg %p102
        $region34: #{tpu_custom_call.1} parent=27 // pred_check_branch
          %272 = sbr.rel (%p270) target = $region36
        $region35: #{tpu_custom_call.1} parent=27 // pred_region
          %273 = dma.done %s266, 128
        $region36: #{tpu_custom_call.1} parent=27 // pred_fallthru
          _
        %s274 = sand.u32 %s59, 1
        %s275 = scalar_lea.sflag [#allocation6], %s274
        %s276 = sand.u32 %s59, 1
        %s277 = smul.addr %s276, 8
        %s278 = scalar_lea.vmem [#allocation5], %s277
        %p279 = pneg %p72
        %p280 = pneg %p69
        %s281 = sand.u32 %s89, 1
        %s282 = scalar_lea.sflag [#allocation9], %s281
        %s283 = sand.u32 %s89, 1
        %s284 = smul.addr %s283, 8
        %s285 = scalar_lea.vmem [#allocation8], %s284
        %p286 = pneg %p102
        %p287 = pneg %p99
        %p288 = pneg %p130
        %p289 = pneg %p127
        %s290 = sand.u32 %s117, 1
        %s291 = scalar_lea.sflag [#allocation7], %s290
        %s292 = sand.u32 %s117, 1
        %s293 = smul.addr %s292, 8
        %s294 = scalar_lea.vmem [#allocation10], %s293
        %p295 = pneg %p158
        %p296 = pneg %p155
        %s297 = sand.u32 %s28, 1
        %s298 = scalar_lea.sflag [#allocation12], %s297
        %s299 = sand.u32 %s145, 1
        %s300 = smul.addr %s299, 8
        %s301 = scalar_lea.vmem [#allocation11], %s300
        %p302 = pneg %p186
        %p303 = pneg %p183
        %s304 = sand.u32 %s28, 1
        %s305 = scalar_lea.sflag [#allocation12], %s304
        %s306 = sand.u32 %s173, 1
        %s307 = smul.addr %s306, 8
        %s308 = scalar_lea.vmem [#allocation13], %s307
        %s309 = sadd.s32 %s34, %s35
        %s310 = sadd.s32 %s34, %s35
        %p311 = scmp.eq.s32.totalorder %s35, 0
        // Predicated region
        $region37: #{tpu_custom_call.1} parent=27 // pred_check
          %p312 = pneg %p311
        $region38: #{tpu_custom_call.1} parent=27 // pred_check_branch
          %314 = sbr.rel (%p312) target = $region40
        $region39: #{tpu_custom_call.1} parent=27 // pred_region
          %315 = vst [vmem:[#allocation2] sm:$0xff] 0.0
          %316 = vst [vmem:[#allocation3] sm:$0xff] 0.0
          %317 = vst [vmem:[#allocation4] sm:$0xff] 0.0
        $region40: #{tpu_custom_call.1} parent=27 // pred_fallthru
          _
        %v318 = vld [vmem:[%s260] sm:$0xff]
        %v319 = vld [vmem:[%s269] sm:$0xff]
        %v320 = vld [vmem:[#allocation2] sm:$0xff]
        %v321 = vadd.f32 %v318, 0.0
        %v322 = vadd.f32 %v320, %v321
        %323 = vst [vmem:[#allocation2] sm:$0xff] %v322
        %v324 = vld [vmem:[#allocation3] sm:$0xff]
        %v325 = vadd.f32 %v319, 0.0
        %v326 = vadd.f32 %v324, %v325
        %327 = vst [vmem:[#allocation3] sm:$0xff] %v326
        %v328 = vld [vmem:[#allocation4] sm:$0xff]
        %v329 = vmul.f32 %v318, %v319
        %v330 = vadd.f32 %v329, 0.0
        %v331 = vadd.f32 %v328, %v330
        %332 = vst [vmem:[#allocation4] sm:$0xff] %v331
        // Predicated region
        $region41: #{tpu_custom_call.1} parent=27 // pred_check
          %p333 = pneg %p311
        $region42: #{tpu_custom_call.1} parent=27 // pred_check_branch
          %335 = sbr.rel (%p333) target = $region44
        $region43: #{tpu_custom_call.1} parent=27 // pred_region
          %v336 = vld [vmem:[#allocation2] sm:$0xff]
          %337 = vst [vmem:[%s294] sm:$0xff] %v336
          %v338 = vld [vmem:[#allocation3] sm:$0xff]
          %339 = vst [vmem:[%s301] sm:$0xff] %v338
          %v340 = vld [vmem:[#allocation4] sm:$0xff]
          %341 = vst [vmem:[%s308] sm:$0xff] %v340
        $region44: #{tpu_custom_call.1} parent=27 // pred_fallthru
          _
        %s342 = sand.u32 %s117, 1
        %s343 = scalar_lea.sflag [#allocation7], %s342
        %s344 = sand.u32 %s117, 1
        %s345 = smul.addr %s344, 8
        %s346 = scalar_lea.vmem [#allocation10], %s345
        %s347 = sand.u32 %s28, 1
        %s348 = scalar_lea.sflag [#allocation12], %s347
        %s349 = sand.u32 %s145, 1
        %s350 = smul.addr %s349, 8
        %s351 = scalar_lea.vmem [#allocation11], %s350
        %s352 = sand.u32 %s28, 1
        %s353 = scalar_lea.sflag [#allocation12], %s352
        %s354 = sand.u32 %s173, 1
        %s355 = smul.addr %s354, 8
        %s356 = scalar_lea.vmem [#allocation13], %s355
        // Predicated region
        $region45: #{tpu_custom_call.1} parent=27 // pred_check
          %p357 = pneg %p127
        $region46: #{tpu_custom_call.1} parent=27 // pred_check_branch
          %359 = sbr.rel (%p357) target = $region48
        $region47: #{tpu_custom_call.1} parent=27 // pred_region
          %s361 = ssub.s32 128, 128
          %362 = vsyncadd %s343, %s361
          %s363 = smul.addr %s34, 8
          %s364 = smul.addr %s33, 8
          %s365 = sadd.s32 %s363, %s364
          %s366 = smul.addr %s365, 16
          %s367 = scalar_lea.hbm %s2, %s366
          %s369 = sshll.u32 %s346, 4
          %s370 = int_to_ptr.vmem [resolvable:$true] %s369
          %372 = dma.vmem_to_hbm [thread:$0]  %s370, 128, %s367, %s343
        $region48: #{tpu_custom_call.1} parent=27 // pred_fallthru
          _
        // Predicated region
        $region49: #{tpu_custom_call.1} parent=27 // pred_check
          %p373 = pneg %p155
        $region50: #{tpu_custom_call.1} parent=27 // pred_check_branch
          %375 = sbr.rel (%p373) target = $region52
        $region51: #{tpu_custom_call.1} parent=27 // pred_region
          %s377 = ssub.s32 128, 128
          %378 = vsyncadd %s348, %s377
          %s379 = smul.addr %s34, 8
          %s380 = smul.addr %s33, 8
          %s381 = sadd.s32 %s379, %s380
          %s382 = smul.addr %s381, 16
          %s383 = scalar_lea.hbm %s3, %s382
          %s385 = sshll.u32 %s351, 4
          %s386 = int_to_ptr.vmem [resolvable:$true] %s385
          %388 = dma.vmem_to_hbm [thread:$0]  %s386, 128, %s383, %s348
        $region52: #{tpu_custom_call.1} parent=27 // pred_fallthru
          _
        // Predicated region
        $region53: #{tpu_custom_call.1} parent=27 // pred_check
          %p389 = pneg %p183
        $region54: #{tpu_custom_call.1} parent=27 // pred_check_branch
          %391 = sbr.rel (%p389) target = $region56
        $region55: #{tpu_custom_call.1} parent=27 // pred_region
          %s393 = ssub.s32 128, 128
          %394 = vsyncadd %s353, %s393
          %s395 = smul.addr %s34, 8
          %s396 = smul.addr %s33, 8
          %s397 = sadd.s32 %s395, %s396
          %s398 = smul.addr %s397, 16
          %s399 = scalar_lea.hbm %s4, %s398
          %s401 = sshll.u32 %s356, 4
          %s402 = int_to_ptr.vmem [resolvable:$true] %s401
          %404 = dma.vmem_to_hbm [thread:$0]  %s402, 128, %s399, %s353
        $region56: #{tpu_custom_call.1} parent=27 // pred_fallthru
          _
      $region28: #{tpu_custom_call.1} parent=5 // pred_fallthru
        _
      %p405 = scmp.le.s32.totalorder 2, %s23
      // Predicated region
      $region57: #{tpu_custom_call.1} parent=5 // pred_check
        %p406 = pneg %p405
      $region58: #{tpu_custom_call.1} parent=5 // pred_check_branch
        %408 = sbr.rel (%p406) target = $region60
      $region59: #{tpu_custom_call.1} parent=5 // pred_region
        %s409 = ssub.s32 %s23, 2
        // Predicated region
        $region61: #{tpu_custom_call.1} parent=59 // pred_check
          %p410 = pneg %p133
        $region62: #{tpu_custom_call.1} parent=59 // pred_check_branch
          %412 = sbr.rel (%p410) target = $region64
        $region63: #{tpu_custom_call.1} parent=59 // pred_region
          %s413 = sand.u32 %s118, 1
          %s414 = scalar_lea.sflag [#allocation7], %s413
          %s415 = sand.u32 %s118, 1
          %s416 = smul.addr %s415, 8
          %s417 = scalar_lea.vmem [#allocation10], %s416
          %418 = dma.done %s414, 128
        $region64: #{tpu_custom_call.1} parent=59 // pred_fallthru
          _
        // Predicated region
        $region65: #{tpu_custom_call.1} parent=59 // pred_check
          %p419 = pneg %p161
        $region66: #{tpu_custom_call.1} parent=59 // pred_check_branch
          %421 = sbr.rel (%p419) target = $region68
        $region67: #{tpu_custom_call.1} parent=59 // pred_region
          %s422 = sand.u32 %s29, 1
          %s423 = scalar_lea.sflag [#allocation12], %s422
          %s424 = sand.u32 %s146, 1
          %s425 = smul.addr %s424, 8
          %s426 = scalar_lea.vmem [#allocation11], %s425
          %427 = dma.done %s423, 128
        $region68: #{tpu_custom_call.1} parent=59 // pred_fallthru
          _
        // Predicated region
        $region69: #{tpu_custom_call.1} parent=59 // pred_check
          %p428 = pneg %p189
        $region70: #{tpu_custom_call.1} parent=59 // pred_check_branch
          %430 = sbr.rel (%p428) target = $region72
        $region71: #{tpu_custom_call.1} parent=59 // pred_region
          %s431 = sand.u32 %s29, 1
          %s432 = scalar_lea.sflag [#allocation12], %s431
          %s433 = sand.u32 %s174, 1
          %s434 = smul.addr %s433, 8
          %s435 = scalar_lea.vmem [#allocation13], %s434
          %436 = dma.done %s432, 128
        $region72: #{tpu_custom_call.1} parent=59 // pred_fallthru
          _
      $region60: #{tpu_custom_call.1} parent=5 // pred_fallthru
        _
    $region6: #{tpu_custom_call.1} parent=1 // loop_footer
      %s27 = sadd.s32 1, %s23
    $region7: #{tpu_custom_call.1} parent=1 // loop_footer_branch
      %22 = sbr.rel target = $region3
    $region8: #{tpu_custom_call.1} parent=1 // loop_exit
      _
    %437 = vsyncpa [#allocation6], 1
    %s438 = scalar_lea.sflag [#allocation6], 1
    %439 = vsyncpa %s438, 1
    %440 = vsyncpa [#allocation9], 1
    %s441 = scalar_lea.sflag [#allocation9], 1
    %442 = vsyncpa %s441, 1
    %443 = vsyncpa [#allocation7], 1
    %s444 = scalar_lea.sflag [#allocation7], 1
    %445 = vsyncpa %s444, 1
    %446 = vsyncpa [#allocation12], 1
    %s447 = scalar_lea.sflag [#allocation12], 1
    %448 = vsyncpa %s447, 1

</llo_original>
